<compile_context>
chip_gen: v7x
topology: tpu7x:2x2x1
jax: 0.10.0
libtpu: 0.0.40
codegen_flags: <defaults>
</compile_context>

<pallas_src>
import functools

import jax
import jax.numpy as jnp
from jax import lax
from jax.experimental import pallas as pl
from jax.experimental.pallas import tpu as pltpu


_LANE = 128
# ~8 MiB per input pipeline buffer (double-buffered by the BlockSpec pipeline).
_TARGET_IN_BLOCK_BYTES = 8 * 1024 * 1024
_VMEM_CAP_BYTES = 48 * 1024 * 1024     # hard cap for vmem_limit_bytes (< v7x 64 MiB)
_VMEM_SLACK_BYTES = 4 * 1024 * 1024    # headroom for compiler-internal scratch
_MAX_BLOCK_HW = 2048                   # multiple of 128


def _round_up(x, m):
    return -(-x // m) * m


def _int_pow(v, n):
    """v**n for a static positive int n via repeated multiplies (VPU only)."""
    result = None
    base = v
    while n > 0:
        if n & 1:
            result = base if result is None else result * base
        n >>= 1
        if n:
            base = base * base
    return result


def _gem_kernel(*refs, eps, hw, block_hw, static_p, needs_mask):
    # refs (dynamic-p path): (p_ref, x_ref, o_ref, acc_ref)
    # refs (static-p path) : (x_ref, o_ref, acc_ref)
    #   p_ref   : SMEM (1,) float32 learnable exponent
    #   x_ref   : VMEM (BLOCK_NC, BLOCK_HW) input tile
    #   o_ref   : VMEM (BLOCK_NC, 1) output tile (resident across the HW axis)
    #   acc_ref : VMEM (BLOCK_NC, 1) float32 running sum of clamp(x, eps)**p
    if static_p is None:
        p_ref, x_ref, o_ref, acc_ref = refs
    else:
        x_ref, o_ref, acc_ref = refs
        p_ref = None

    k = pl.program_id(1)
    last_k = pl.num_programs(1) - 1

    @pl.when(k == 0)
    def _():
        acc_ref[...] = jnp.zeros_like(acc_ref)

    x = x_ref[...].astype(jnp.float32)
    v = jnp.maximum(x, eps)
    if static_p is not None:
        # Integer power on the 4-wide VALU; keeps the single EUP slot free.
        vp = _int_pow(v, static_p)
    else:
        # General learnable-p path (lowers to exp(p*log(v)); v >= eps > 0).
        vp = jnp.power(v, p_ref[0])

    if needs_mask:
        # Mask work only on the single padded tail block; all other blocks
        # accumulate unmasked so the hot path stays pure load/mul/add.
        @pl.when(k != last_k)
        def _():
            acc_ref[...] += jnp.sum(vp, axis=-1, keepdims=True)

        @pl.when(k == last_k)
        def _():
            lane = lax.broadcasted_iota(jnp.int32, vp.shape, 1) + k * block_hw
            vp_masked = jnp.where(lane < hw, vp, 0.0)  # select, NOT multiply-by-mask
            acc_ref[...] += jnp.sum(vp_masked, axis=-1, keepdims=True)
    else:
        acc_ref[...] += jnp.sum(vp, axis=-1, keepdims=True)

    @pl.when(k == last_k)
    def _():
        m = acc_ref[...] * (1.0 / hw)          # true-hw divisor (not padded)
        inv_p = (1.0 / static_p) if static_p is not None else (1.0 / p_ref[0])
        o_ref[...] = jnp.power(m, inv_p).astype(o_ref.dtype)


def _static_int_p(p):
    """Return p as a static small positive int if it is one, else None."""
    try:
        pf = float(p)  # raises for traced values
    except Exception:
        return None
    if pf == int(pf) and 1 <= int(pf) <= 32:
        return int(pf)
    return None


def gem_pallas(x, p, eps=1e-6):
    """x: (N, C, H, W); p: scalar (python number or jax scalar). -> (N, C, 1, 1)."""
    n, c, h, w = x.shape
    nc, hw = n * c, h * w
    x2d = x.reshape(nc, hw)

    static_p = _static_int_p(p)

    in_itemsize = jnp.dtype(x.dtype).itemsize
    out_itemsize = in_itemsize
    sublane = max(8, 32 // in_itemsize)        # 8 (f32), 16 (bf16), 32 (int8/fp8)

    # ---- tile-size derivation (dtype- and lane-padding aware) ----
    block_hw = hw if hw <= _MAX_BLOCK_HW else _MAX_BLOCK_HW
    padded_hw = _round_up(block_hw, _LANE)                 # VMEM lane footprint
    in_row_bytes = padded_hw * in_itemsize                 # input stays in its dtype
    out_row_bytes = _LANE * out_itemsize                   # (bnc, 1) pads to 128 lanes
    acc_row_bytes = _LANE * 4                              # f32 accumulator scratch
    # 2x double-buffered input + 2x double-buffered output + 1x accumulator.
    per_row_bytes = 2 * in_row_bytes + 2 * out_row_bytes + acc_row_bytes

    rows_from_target = _TARGET_IN_BLOCK_BYTES // in_row_bytes
    rows_from_cap = (_VMEM_CAP_BYTES - _VMEM_SLACK_BYTES) // per_row_bytes
    rows_budget = max(sublane, min(rows_from_target, rows_from_cap))

    # Guarantee >= 2 blocks on the "parallel" NC axis whenever NC is splittable
    # so both v7x TensorCores get work; costs at most one extra ~0.35 us grid
    # step on single-TC chips (v5e/v6e).
    half_nc = _round_up(-(-nc // 2), sublane)
    if half_nc < nc:
        rows_budget = min(rows_budget, half_nc)

    if nc <= rows_budget:
        block_nc = nc                                      # full extent is always legal
    else:
        block_nc = max(sublane, (rows_budget // sublane) * sublane)

    grid = (pl.cdiv(nc, block_nc), pl.cdiv(hw, block_hw))
    needs_mask = (hw % block_hw) != 0

    # ---- VMEM accounting (includes lane-padded (block_nc, 1) out/acc blocks) ----
    in_block_bytes = block_nc * in_row_bytes
    out_block_bytes = _round_up(block_nc, sublane) * out_row_bytes
    acc_block_bytes = _round_up(block_nc, 8) * acc_row_bytes
    footprint = 2 * in_block_bytes + 2 * out_block_bytes + acc_block_bytes
    vmem_limit = int(min(max(footprint + _VMEM_SLACK_BYTES, 16 << 20), _VMEM_CAP_BYTES))

    kernel = functools.partial(
        _gem_kernel, eps=float(eps), hw=hw, block_hw=block_hw,
        static_p=static_p, needs_mask=needs_mask)

    x_spec = pl.BlockSpec((block_nc, block_hw), lambda i, k: (i, k))
    if static_p is not None:
        # Static-p fast path: no dead p operand is carried per grid step.
        in_specs = [x_spec]
        args = (x2d,)
    else:
        p_arr = jnp.asarray(p, dtype=jnp.float32).reshape(1)
        in_specs = [pl.BlockSpec(memory_space=pltpu.MemorySpace.SMEM), x_spec]
        args = (p_arr, x2d)

    out2d = pl.pallas_call(
        kernel,
        out_shape=jax.ShapeDtypeStruct((nc, 1), x.dtype),
        grid=grid,
        in_specs=in_specs,
        out_specs=pl.BlockSpec((block_nc, 1), lambda i, k: (i, 0)),
        scratch_shapes=[pltpu.VMEM((block_nc, 1), jnp.float32)],
        compiler_params=pltpu.CompilerParams(
            dimension_semantics=("parallel", "arbitrary"),
            vmem_limit_bytes=vmem_limit,
        ),
    )(*args)

    return out2d.reshape(n, c, 1, 1)


def gem_reference(x, p, eps=1e-6):
    v = jnp.power(jnp.maximum(x.astype(jnp.float32), eps), p)
    return jnp.power(jnp.mean(v, axis=(-2, -1), keepdims=True), 1.0 / p).astype(x.dtype)


if __name__ == "__main__":
    key = jax.random.PRNGKey(0)
    k0, k1 = jax.random.split(key)
    eps = 1e-6

    # 1) consensus p=3 -> static integer-power fast path (no per-element EUP, no p operand)
    x = jax.random.normal(k0, (2, 4, 16, 16), dtype=jnp.float32)
    out = jax.block_until_ready(gem_pallas(x, 3.0, eps))
    ref = gem_reference(x, 3.0, eps)
    assert out.shape == (2, 4, 1, 1), out.shape
    assert jnp.allclose(out, ref, atol=1e-5, rtol=1e-4), (out, ref)

    # 2) general learnable-p path (p is a traced array under jit -> SMEM scalar)
    p_arr = jnp.float32(3.0)
    out2 = jax.block_until_ready(jax.jit(lambda xx, pp: gem_pallas(xx, pp, eps))(x, p_arr))
    assert jnp.allclose(out2, ref, atol=1e-5, rtol=1e-4), (out2, ref)

    # 3) HW-tiled + masked-tail path (hw = 2304 > 2048, not a multiple of it)
    x3 = jax.random.normal(k1, (1, 8, 48, 48), dtype=jnp.float32)
    out3 = jax.block_until_ready(gem_pallas(x3, 3.0, eps))
    ref3 = gem_reference(x3, 3.0, eps)
    assert out3.shape == (1, 8, 1, 1), out3.shape
    assert jnp.allclose(out3, ref3, atol=1e-5, rtol=1e-4), (out3, ref3)

    # 4) bf16 input -> exercises dtype-aware tile sizing / sublane rounding
    xb = jax.random.normal(k0, (2, 4, 16, 16), dtype=jnp.bfloat16)
    outb = jax.block_until_ready(gem_pallas(xb, 3.0, eps))
    refb = gem_reference(xb, 3.0, eps)
    assert outb.shape == (2, 4, 1, 1), outb.shape
    assert jnp.allclose(outb.astype(jnp.float32), refb.astype(jnp.float32),
                        atol=2e-2, rtol=2e-2), (outb, refb)

    print("KERNEL_OK")
</pallas_src>

<mosaic_0001>
module attributes {stable_mosaic.version = 11 : i64} {
  func.func @_gem_kernel(%arg0: i32, %arg1: i32, %arg2: memref<8x256xf32, #tpu.memory_space<vmem>>, %arg3: memref<8x1xf32, #tpu.memory_space<vmem>>, %arg4: memref<8x1xf32, #tpu.memory_space<vmem>>) attributes {dimension_semantics = [#tpu.dimension_semantics<parallel>, #tpu.dimension_semantics<arbitrary>], iteration_bounds = array<i64: 1, 1>, scalar_prefetch = 0 : i64, scratch_operands = 1 : i64, tpu.core_type = #tpu.core_type<tc>, window_params = [{transform_indices = @transform_0, window_bounds = array<i64: 8, 256>}, {transform_indices = @transform_1, window_bounds = array<i64: 8, 1>}]} {
    %c0_i32 = arith.constant 0 : i32
    %0 = arith.cmpi eq, %arg1, %c0_i32 : i32
    %1 = arith.extui %0 : i1 to i32
    %c0_i32_0 = arith.constant 0 : i32
    %2 = arith.cmpi ne, %1, %c0_i32_0 : i32
    scf.if %2 {
      %cst_9 = arith.constant 0.000000e+00 : f32
      %16 = vector.broadcast %cst_9 : f32 to vector<8x1xf32>
      %c0_10 = arith.constant 0 : index
      %c0_11 = arith.constant 0 : index
      %17 = vector.load %arg4[%c0_10, %c0_11] : memref<8x1xf32, #tpu.memory_space<vmem>>, vector<8x1xf32>
      tpu.vector_store %arg4[%c0_10, %c0_11], %16 {strides = array<i32>} : memref<8x1xf32, #tpu.memory_space<vmem>>, vector<8x1xf32>,
    } else {
    }
    %c0 = arith.constant 0 : index
    %c0_1 = arith.constant 0 : index
    %3 = vector.load %arg2[%c0, %c0_1] : memref<8x256xf32, #tpu.memory_space<vmem>>, vector<8x256xf32>
    %cst = arith.constant 9.99999997E-7 : f32
    %4 = vector.broadcast %cst : f32 to vector<8x256xf32>
    %5 = arith.maximumf %3, %4 : vector<8x256xf32>
    %6 = arith.mulf %5, %5 : vector<8x256xf32>
    %7 = arith.mulf %5, %6 : vector<8x256xf32>
    %c0_2 = arith.constant 0 : index
    %c0_3 = arith.constant 0 : index
    %8 = vector.load %arg4[%c0_2, %c0_3] : memref<8x1xf32, #tpu.memory_space<vmem>>, vector<8x1xf32>
    %cst_4 = arith.constant dense<0.000000e+00> : vector<8xf32>
    %9 = vector.multi_reduction <add>, %7, %cst_4 [1] : vector<8x256xf32> to vector<8xf32>
    %10 = vector.shape_cast %9 : vector<8xf32> to vector<8x1xf32>
    %11 = arith.addf %8, %10 : vector<8x1xf32>
    %c0_5 = arith.constant 0 : index
    %c0_6 = arith.constant 0 : index
    %12 = vector.load %arg4[%c0_5, %c0_6] : memref<8x1xf32, #tpu.memory_space<vmem>>, vector<8x1xf32>
    tpu.vector_store %arg4[%c0_5, %c0_6], %11 {strides = array<i32>} : memref<8x1xf32, #tpu.memory_space<vmem>>, vector<8x1xf32>,
    %c0_i32_7 = arith.constant 0 : i32
    %13 = arith.cmpi eq, %arg1, %c0_i32_7 : i32
    %14 = arith.extui %13 : i1 to i32
    %c0_i32_8 = arith.constant 0 : i32
    %15 = arith.cmpi ne, %14, %c0_i32_8 : i32
    scf.if %15 {
      %c0_9 = arith.constant 0 : index
      %c0_10 = arith.constant 0 : index
      %16 = vector.load %arg4[%c0_9, %c0_10] : memref<8x1xf32, #tpu.memory_space<vmem>>, vector<8x1xf32>
      %cst_11 = arith.constant 3.906250e-03 : f32
      %17 = vector.broadcast %cst_11 : f32 to vector<8x1xf32>
      %18 = arith.mulf %16, %17 : vector<8x1xf32>
      %cst_12 = arith.constant 0.333333343 : f32
      %19 = vector.broadcast %cst_12 : f32 to vector<8x1xf32>
      %20 = math.powf %18, %19 : vector<8x1xf32>
      %c0_13 = arith.constant 0 : index
      %c0_14 = arith.constant 0 : index
      %21 = vector.load %arg3[%c0_13, %c0_14] : memref<8x1xf32, #tpu.memory_space<vmem>>, vector<8x1xf32>
      tpu.vector_store %arg3[%c0_13, %c0_14], %20 {strides = array<i32>} : memref<8x1xf32, #tpu.memory_space<vmem>>, vector<8x1xf32>,
    } else {
    }
    return
  }
  func.func @transform_0(%arg0: i32, %arg1: i32) -> (i32, i32) {
    %c0_i32 = arith.constant 0 : i32
    return %arg0, %arg1 : i32, i32
  }
  func.func @transform_1(%arg0: i32, %arg1: i32) -> (i32, i32) {
    %c0_i32 = arith.constant 0 : i32
    %c0_i32_0 = arith.constant 0 : i32
    return %arg0, %c0_i32 : i32, i32
  }
}

</mosaic_0001>

<llo_original>
// kernel: tpu_custom_call.1
$region0: #{tpu_custom_call.1}
  #allocation0 [shape = 'u32[]', space=smem, size = 0x4, offset = 0x4, fixed_abs, tag = 'smem constant byte address 0x4 - core index']
  #allocation1 [shape = 'u32[144,128]{1,0:T(1,128)}', space=vmem, size = 0x12000, scoped, tag = 'internal scratch']
  #allocation2 [shape = 'f32[8,1]{1,0:T(8,128)}', space=vmem, size = 0x1000, scoped, tag = 'scratch operand']
  %s0 = inlined_call_operand.hbm [shape: f32[8,256], index: 0, kind: input, shape index: {}]
  %s1 = inlined_call_operand.vmem [shape: f32[8,1], index: 1, kind: output, shape index: {}]
  %s2 = sld [smem:[#allocation0]]
  $region26: #{tpu_custom_call.1} parent=0
    _
  %s4 = ssub.s32 1, %s2
  %s5 = scalar_select 0, %s4, %s2
  $region1: #{tpu_custom_call.1} parent=0
    #allocation3 [shape = 'u8[8192]{0}', space=vmem, size = 0x2000, scoped, tag = 'input window, operand 0, single buffered']
    #allocation4 [shape = 's32[1]{0}', space=sflag, size = 0x4, scoped, tag = 'scoped memory for tpu_custom_call.1']
    %6 = vsyncpa [#allocation4], 0
    // Predicated region
    $region2: #{tpu_custom_call.1} parent=1 // pred_check
      _
    $region3: #{tpu_custom_call.1} parent=1 // pred_check_branch
      %8 = sbr.rel (0) target = $region5
    $region4: #{tpu_custom_call.1} parent=1 // pred_region
      %s10 = ssub.s32 256, 256
      %11 = vsyncadd [#allocation4], %s10
      %s13 = sshll.u32 [#allocation3], 4
      %s14 = int_to_ptr.vmem [resolvable:$true] %s13
      %16 = dma.hbm_to_vmem [thread:$0]  %s0, 256, %s14, [#allocation4]
    $region5: #{tpu_custom_call.1} parent=1 // pred_fallthru
      _
    // Predicated region
    $region6: #{tpu_custom_call.1} parent=1 // pred_check
      _
    $region7: #{tpu_custom_call.1} parent=1 // pred_check_branch
      %18 = sbr.rel (0) target = $region9
    $region8: #{tpu_custom_call.1} parent=1 // pred_region
      %19 = dma.done [#allocation4], 256
    $region9: #{tpu_custom_call.1} parent=1 // pred_fallthru
      _
    %p20 = scmp.eq.s32.totalorder 0, 0
    // Predicated region
    $region10: #{tpu_custom_call.1} parent=1 // pred_check
      %p21 = pneg %p20
    $region11: #{tpu_custom_call.1} parent=1 // pred_check_branch
      %23 = sbr.rel (%p21) target = $region13
    $region12: #{tpu_custom_call.1} parent=1 // pred_region
      %vm24 = vcmask 7168
      %25 = vst.msk [vmem:[#allocation2] sm:$0xff] %vm24, 0.0
    $region13: #{tpu_custom_call.1} parent=1 // pred_fallthru
      _
    %v26 = vld [vmem:[#allocation3] sm:$0xff]
    %v27 = vld [vmem:[#allocation3 + $0x8] sm:$0xff]
    %v28 = vmax.f32 %v26, 1e-06
    %v29 = vmax.f32 %v27, 1e-06
    %v30 = vmul.f32 %v28, %v28
    %v31 = vmul.f32 %v29, %v29
    %v32 = vmul.f32 %v28, %v30
    %v33 = vmul.f32 %v29, %v31
    %v34 = vld [vmem:[#allocation2] sm:$0xff]
    %v35 = vadd.f32 %v32, %v33
    %36 = vadd.xlane.f32.xlu0 %v35
    %v37 = vpop.xlane.xlu0 %36
    %v38 = vadd.f32 %v34, %v37
    %vm39 = vcmask 7168
    %40 = vst.msk [vmem:[#allocation2] sm:$0xff] %vm39, %v38
    // Predicated region
    $region14: #{tpu_custom_call.1} parent=1 // pred_check
      %p41 = pneg %p20
    $region15: #{tpu_custom_call.1} parent=1 // pred_check_branch
      %43 = sbr.rel (%p41) target = $region17
    $region16: #{tpu_custom_call.1} parent=1 // pred_region
      %v44 = vld [vmem:[#allocation2] sm:$0xff]
      %v45 = vmul.f32 %v44, 0.00390625
      %v46 = vpow.f32 %v45, 0.33333334
      %47 = vst.msk [vmem:[%s1] sm:$0xff] %vm39, %v46
    $region17: #{tpu_custom_call.1} parent=1 // pred_fallthru
      _
    // Predicated region
    $region18: #{tpu_custom_call.1} parent=1 // pred_check
      _
    $region19: #{tpu_custom_call.1} parent=1 // pred_check_branch
      %49 = sbr.rel (0) target = $region21
    $region20: #{tpu_custom_call.1} parent=1 // pred_region
      _
    $region21: #{tpu_custom_call.1} parent=1 // pred_fallthru
      _
    // Predicated region
    $region22: #{tpu_custom_call.1} parent=1 // pred_check
      _
    $region23: #{tpu_custom_call.1} parent=1 // pred_check_branch
      %51 = sbr.rel (0) target = $region25
    $region24: #{tpu_custom_call.1} parent=1 // pred_region
      _
    $region25: #{tpu_custom_call.1} parent=1 // pred_fallthru
      _
    %52 = vsyncpa [#allocation4], 1

</llo_original>
